<compile_context>
chip_gen: v6e
topology: v6e:2x2x1
jax: 0.10.0
libtpu: 0.0.40
codegen_flags: <defaults>
</compile_context>

<pallas_src>
import functools

import jax
import jax.numpy as jnp
from jax.experimental import pallas as pl
from jax.experimental.pallas import tpu as pltpu


def _round_up(n: int, m: int) -> int:
    return ((n + m - 1) // m) * m


def _cdiv(a: int, b: int) -> int:
    return (a + b - 1) // b


def state_value_kernel(x_ref, w1_ref, b1_ref, w2_ref, b2_ref, o_ref):
    """One batch tile (P samples packed per 128-lane row).

    x_ref  : (TILE_R, P*obs)     f32  -- streamed per grid step
    w1_ref : (P*obs, P*hidden)   f32  -- block-diagonal W1, resident in VMEM
    b1_ref : (1, P*hidden)       f32  -- tiled bias, resident
    w2_ref : (P*hidden, P)       f32  -- block-diagonal W2, resident
    b2_ref : (1, 1)              f32  -- SMEM scalar
    o_ref  : (TILE_R, P)         f32
    """
    # Layer 1 on the MXU (f32 operands, f32 accumulation).
    h = jnp.dot(x_ref[...], w1_ref[...], preferred_element_type=jnp.float32)
    # Bias + ReLU on the VPU.
    h = jnp.maximum(h + b1_ref[...], 0.0)
    # Layer 2 also on the MXU (block-diagonal W2), plus SMEM scalar bias.
    v = jnp.dot(h, w2_ref[...], preferred_element_type=jnp.float32) + b2_ref[0, 0]
    o_ref[...] = v.astype(o_ref.dtype)


@functools.partial(jax.jit, static_argnames=("tile_b",))
def state_value_forward(x, w1, b1, w2, b2, *, tile_b: int = 32768):
    """x: [B, obs]  w1: [obs, 32]  b1: [1, 32]  w2: [32, 1]  b2: [1, 1] -> [B, 1]"""
    B, obs = x.shape
    hidden = w1.shape[1]

    # Pack P consecutive samples per 128-lane packed row when obs divides 128.
    P = 128 // obs if (obs <= 128 and 128 % obs == 0) else 1
    W = P * obs          # packed row width (128 when P > 1)
    H = P * hidden       # block-diagonal hidden width

    # Tile sizing: big tiles to amortize per-grid-step overhead, capped so the
    # double-buffered x tile + [TILE_R, H] f32 intermediate stay well inside VMEM.
    tile_b = max(8 * P, min(int(tile_b), 65536))
    tile_r_cap = max(8, _round_up(_cdiv(tile_b, P), 8))

    R_min = _cdiv(B, P)                                # packed rows needed
    num_tiles = max(1, _cdiv(R_min, tile_r_cap))
    TILE_R = _round_up(_cdiv(R_min, num_tiles), 8)     # bounded padding waste
    R_pad = num_tiles * TILE_R
    B_pad = R_pad * P

    # Layout plumbing: pad only the ragged tail (no transpose, no dtype pass on x).
    x_f = x.astype(jnp.float32)
    if B_pad != B:
        x_f = jnp.pad(x_f, ((0, B_pad - B), (0, 0)))
    x_packed = x_f.reshape(R_pad, W)                   # contiguous -> zero-copy reshape

    eye_p = jnp.eye(P, dtype=jnp.float32)
    w1_blk = jnp.kron(eye_p, w1.astype(jnp.float32))                       # (W, H)
    w2_blk = jnp.kron(eye_p, w2.astype(jnp.float32))                       # (H, P)
    b1_blk = jnp.tile(b1.reshape(1, hidden).astype(jnp.float32), (1, P))   # (1, H)
    b2_s = b2.reshape(1, 1).astype(jnp.float32)                            # SMEM scalar

    out = pl.pallas_call(
        state_value_kernel,
        out_shape=jax.ShapeDtypeStruct((R_pad, P), jnp.float32),
        grid=(num_tiles,),
        in_specs=[
            # x streams tile-by-tile (double-buffered by the Pallas pipeline).
            pl.BlockSpec((TILE_R, W), lambda i: (i, 0)),
            # Weights / biases: constant block index -> resident in VMEM, single DMA.
            pl.BlockSpec((W, H), lambda i: (0, 0)),
            pl.BlockSpec((1, H), lambda i: (0, 0)),
            pl.BlockSpec((H, P), lambda i: (0, 0)),
            # Scalar output bias via SMEM (no VMEM buffer).
            pl.BlockSpec(memory_space=pltpu.MemorySpace.SMEM),
        ],
        out_specs=pl.BlockSpec((TILE_R, P), lambda i: (i, 0)),
        compiler_params=pltpu.CompilerParams(
            dimension_semantics=("parallel",),
            vmem_limit_bytes=32 * 1024 * 1024,
        ),
    )(x_packed, w1_blk, b1_blk, w2_blk, b2_s)

    # Packed output [R_pad, P] row r holds samples r*P .. r*P+P-1 in order:
    # flattening is exactly batch order; slice off the padded tail.
    return out.reshape(-1)[:B].reshape(B, 1).astype(x.dtype)


def state_value_reference(x, w1, b1, w2, b2):
    """Plain-JAX forward (same math as the PyTorch module), f32."""
    return jnp.maximum(x @ w1 + b1, 0.0) @ w2 + b2


def init_params(key, observation_space, hidden=32):
    # PyTorch nn.Linear default init: U(-1/sqrt(fan_in), 1/sqrt(fan_in))
    k1, k2, k3, k4 = jax.random.split(key, 4)
    bound1 = 1.0 / jnp.sqrt(observation_space)
    bound2 = 1.0 / jnp.sqrt(hidden)
    w1 = jax.random.uniform(k1, (observation_space, hidden), jnp.float32, -bound1, bound1)
    b1 = jax.random.uniform(k2, (1, hidden), jnp.float32, -bound1, bound1)
    w2 = jax.random.uniform(k3, (hidden, 1), jnp.float32, -bound2, bound2)
    b2 = jax.random.uniform(k4, (1, 1), jnp.float32, -bound2, bound2)
    return w1, b1, w2, b2


if __name__ == "__main__":
    key = jax.random.PRNGKey(0)
    k_x1, k_x2, k_p = jax.random.split(key, 3)

    observation_space = 16
    w1, b1, w2, b2 = init_params(k_p, observation_space)

    # Case 1: tiny batch, default (large) tile -> single grid step.
    x_small = jax.random.normal(k_x1, (8, observation_space), jnp.float32)
    out_small = state_value_forward(x_small, w1, b1, w2, b2)
    jax.block_until_ready(out_small)
    ref_small = state_value_reference(x_small, w1, b1, w2, b2)
    assert out_small.shape == (8, 1)
    assert jnp.allclose(out_small, ref_small, atol=2e-2, rtol=2e-2)

    # Case 2: non-multiple batch with a small tile to exercise a multi-step grid
    # (272 samples -> 34 packed rows -> 3 tiles of 16 rows).
    x_grid = jax.random.normal(k_x2, (272, observation_space), jnp.float32)
    out_grid = state_value_forward(x_grid, w1, b1, w2, b2, tile_b=128)
    jax.block_until_ready(out_grid)
    ref_grid = state_value_reference(x_grid, w1, b1, w2, b2)
    assert out_grid.shape == (272, 1)
    assert jnp.allclose(out_grid, ref_grid, atol=2e-2, rtol=2e-2)

    print("KERNEL_OK")
</pallas_src>

<mosaic_0001>
module attributes {stable_mosaic.version = 11 : i64} {
  func.func @state_value_kernel(%arg0: i32, %arg1: memref<8x128xf32, #tpu.memory_space<vmem>>, %arg2: memref<128x256xf32, #tpu.memory_space<vmem>>, %arg3: memref<1x256xf32, #tpu.memory_space<vmem>>, %arg4: memref<256x8xf32, #tpu.memory_space<vmem>>, %arg5: memref<1x1xf32, #tpu.memory_space<smem>>, %arg6: memref<8x8xf32, #tpu.memory_space<vmem>>) attributes {dimension_semantics = [#tpu.dimension_semantics<parallel>], iteration_bounds = array<i64: 1>, scalar_prefetch = 0 : i64, scratch_operands = 0 : i64, tpu.core_type = #tpu.core_type<tc>, window_params = [{transform_indices = @transform_0, window_bounds = array<i64: 8, 128>}, {pipeline_mode = #tpu.pipeline_mode<synchronous>, transform_indices = @transform_1, window_bounds = array<i64: 128, 256>}, {pipeline_mode = #tpu.pipeline_mode<synchronous>, transform_indices = @transform_2, window_bounds = array<i64: 1, 256>}, {pipeline_mode = #tpu.pipeline_mode<synchronous>, transform_indices = @transform_3, window_bounds = array<i64: 256, 8>}, {transform_indices = @transform_4, window_bounds = array<i64: 1, 1>}, {transform_indices = @transform_5, window_bounds = array<i64: 8, 8>}]} {
    %c0 = arith.constant 0 : index
    %c0_0 = arith.constant 0 : index
    %0 = vector.load %arg1[%c0, %c0_0] : memref<8x128xf32, #tpu.memory_space<vmem>>, vector<8x128xf32>
    %c0_1 = arith.constant 0 : index
    %c0_2 = arith.constant 0 : index
    %1 = vector.load %arg2[%c0_1, %c0_2] : memref<128x256xf32, #tpu.memory_space<vmem>>, vector<128x256xf32>
    %cst = arith.constant dense<0.000000e+00> : vector<8x256xf32>
    %2 = tpu.matmul %0, %1, %cst {dimension_numbers = #tpu.dot_dimension_numbers<[1], [0], [0], [1], [0, 0, 1, 1], [], []>} : vector<8x128xf32>, vector<128x256xf32>, vector<8x256xf32> -> vector<8x256xf32>
    %c0_3 = arith.constant 0 : index
    %c0_4 = arith.constant 0 : index
    %3 = vector.load %arg3[%c0_3, %c0_4] : memref<1x256xf32, #tpu.memory_space<vmem>>, vector<1x256xf32>
    %4 = vector.broadcast %3 : vector<1x256xf32> to vector<8x256xf32>
    %5 = arith.addf %2, %4 : vector<8x256xf32>
    %cst_5 = arith.constant 0.000000e+00 : f32
    %6 = vector.broadcast %cst_5 : f32 to vector<8x256xf32>
    %7 = arith.maximumf %5, %6 : vector<8x256xf32>
    %c0_6 = arith.constant 0 : index
    %c0_7 = arith.constant 0 : index
    %8 = vector.load %arg4[%c0_6, %c0_7] : memref<256x8xf32, #tpu.memory_space<vmem>>, vector<256x8xf32>
    %cst_8 = arith.constant dense<0.000000e+00> : vector<8x8xf32>
    %9 = tpu.matmul %7, %8, %cst_8 {dimension_numbers = #tpu.dot_dimension_numbers<[1], [0], [0], [1], [0, 0, 1, 1], [], []>} : vector<8x256xf32>, vector<256x8xf32>, vector<8x8xf32> -> vector<8x8xf32>
    %c0_9 = arith.constant 0 : index
    %c0_10 = arith.constant 0 : index
    %10 = memref.load %arg5[%c0_9, %c0_10] : memref<1x1xf32, #tpu.memory_space<smem>>
    %11 = vector.broadcast %10 : f32 to vector<8x8xf32>
    %12 = arith.addf %9, %11 : vector<8x8xf32>
    %c0_11 = arith.constant 0 : index
    %c0_12 = arith.constant 0 : index
    %13 = vector.load %arg6[%c0_11, %c0_12] : memref<8x8xf32, #tpu.memory_space<vmem>>, vector<8x8xf32>
    tpu.vector_store %arg6[%c0_11, %c0_12], %12 {strides = array<i32>} : memref<8x8xf32, #tpu.memory_space<vmem>>, vector<8x8xf32>,
    return
  }
  func.func @transform_0(%arg0: i32) -> (i32, i32) {
    %c0_i32 = arith.constant 0 : i32
    %c0_i32_0 = arith.constant 0 : i32
    return %arg0, %c0_i32 : i32, i32
  }
  func.func @transform_1(%arg0: i32) -> (i32, i32) {
    %c0_i32 = arith.constant 0 : i32
    %c0_i32_0 = arith.constant 0 : i32
    %c0_i32_1 = arith.constant 0 : i32
    return %c0_i32, %c0_i32_0 : i32, i32
  }
  func.func @transform_2(%arg0: i32) -> (i32, i32) {
    %c0_i32 = arith.constant 0 : i32
    %c0_i32_0 = arith.constant 0 : i32
    %c0_i32_1 = arith.constant 0 : i32
    return %c0_i32, %c0_i32_0 : i32, i32
  }
  func.func @transform_3(%arg0: i32) -> (i32, i32) {
    %c0_i32 = arith.constant 0 : i32
    %c0_i32_0 = arith.constant 0 : i32
    %c0_i32_1 = arith.constant 0 : i32
    return %c0_i32, %c0_i32_0 : i32, i32
  }
  func.func @transform_4(%arg0: i32) -> (i32, i32) {
    %c0_i32 = arith.constant 0 : i32
    %c0_i32_0 = arith.constant 0 : i32
    %c0_i32_1 = arith.constant 0 : i32
    return %c0_i32, %c0_i32_0 : i32, i32
  }
  func.func @transform_5(%arg0: i32) -> (i32, i32) {
    %c0_i32 = arith.constant 0 : i32
    %c0_i32_0 = arith.constant 0 : i32
    return %arg0, %c0_i32 : i32, i32
  }
}

</mosaic_0001>

<llo_original>
// kernel: state_value_forward.1
$region0: #{state_value_forward.1}
  #allocation0 [shape = 'u32[]', space=smem, size = 0x4, offset = 0x4, fixed_abs, tag = 'smem constant byte address 0x4 - core index']
  #allocation1 [shape = 'u32[144,128]{1,0:T(1,128)}', space=vmem, size = 0x12000, scoped, tag = 'internal scratch']
  #allocation2 [shape = 'f32[1,1]{1,0:T(1,128)S(6)}', space=smem, size = 0x200, scoped, tag = 'scoped memory for state_value_forward.1']
  %s0 = inlined_call_operand.vmem [shape: f32[8,128], index: 0, kind: input, shape index: {}]
  %s1 = inlined_call_operand.vmem [shape: f32[128,256], index: 1, kind: input, shape index: {}]
  %s2 = inlined_call_operand.vmem [shape: f32[1,256], index: 2, kind: input, shape index: {}]
  %s3 = inlined_call_operand.vmem [shape: f32[256,8], index: 3, kind: input, shape index: {}]
  %s4 = inlined_call_operand.<no memory space> [shape: f32[1,1], index: 4, kind: input, shape index: {}]
  %s5 = inlined_call_operand.vmem [shape: f32[8,8], index: 5, kind: output, shape index: {}]
  %s6 = sld [smem:[#allocation0]]
  $region30: #{state_value_forward.1} parent=0
    _
  %s8 = ssub.s32 1, %s6
  %s9 = scalar_select 0, %s8, %s6
  %10 = sst [smem:[#allocation2]] %s4
  // Predicated region
  $region2: #{state_value_forward.1} parent=0 // pred_check
    _
  $region3: #{state_value_forward.1} parent=0 // pred_check_branch
    %12 = sbr.rel (0) target = $region5
  $region4: #{state_value_forward.1} parent=0 // pred_region
    _
  $region5: #{state_value_forward.1} parent=0 // pred_fallthru
    _
  // Predicated region
  $region6: #{state_value_forward.1} parent=0 // pred_check
    _
  $region7: #{state_value_forward.1} parent=0 // pred_check_branch
    %14 = sbr.rel (0) target = $region9
  $region8: #{state_value_forward.1} parent=0 // pred_region
    _
  $region9: #{state_value_forward.1} parent=0 // pred_fallthru
    _
  // Predicated region
  $region10: #{state_value_forward.1} parent=0 // pred_check
    _
  $region11: #{state_value_forward.1} parent=0 // pred_check_branch
    %16 = sbr.rel (0) target = $region13
  $region12: #{state_value_forward.1} parent=0 // pred_region
    _
  $region13: #{state_value_forward.1} parent=0 // pred_fallthru
    _
  // Predicated region
  $region14: #{state_value_forward.1} parent=0 // pred_check
    _
  $region15: #{state_value_forward.1} parent=0 // pred_check_branch
    %18 = sbr.rel (0) target = $region17
  $region16: #{state_value_forward.1} parent=0 // pred_region
    _
  $region17: #{state_value_forward.1} parent=0 // pred_fallthru
    _
  // Predicated region
  $region18: #{state_value_forward.1} parent=0 // pred_check
    _
  $region19: #{state_value_forward.1} parent=0 // pred_check_branch
    %20 = sbr.rel (0) target = $region21
  $region20: #{state_value_forward.1} parent=0 // pred_region
    _
  $region21: #{state_value_forward.1} parent=0 // pred_fallthru
    _
  %v21 = vld [vmem:[%s0] sm:$0xff]
  %v22 = vld [vmem:[%s1] sm:$0xff]
  %v23 = vld [vmem:[%s1 + $0x8] sm:$0xff]
  %v24 = vld [vmem:[%s1 + $0x10] sm:$0xff]
  %v25 = vld [vmem:[%s1 + $0x18] sm:$0xff]
  %v26 = vld [vmem:[%s1 + $0x20] sm:$0xff]
  %v27 = vld [vmem:[%s1 + $0x28] sm:$0xff]
  %v28 = vld [vmem:[%s1 + $0x30] sm:$0xff]
  %v29 = vld [vmem:[%s1 + $0x38] sm:$0xff]
  %v30 = vld [vmem:[%s1 + $0x40] sm:$0xff]
  %v31 = vld [vmem:[%s1 + $0x48] sm:$0xff]
  %v32 = vld [vmem:[%s1 + $0x50] sm:$0xff]
  %v33 = vld [vmem:[%s1 + $0x58] sm:$0xff]
  %v34 = vld [vmem:[%s1 + $0x60] sm:$0xff]
  %v35 = vld [vmem:[%s1 + $0x68] sm:$0xff]
  %v36 = vld [vmem:[%s1 + $0x70] sm:$0xff]
  %v37 = vld [vmem:[%s1 + $0x78] sm:$0xff]
  %v38 = vld [vmem:[%s1 + $0x80] sm:$0xff]
  %v39 = vld [vmem:[%s1 + $0x88] sm:$0xff]
  %v40 = vld [vmem:[%s1 + $0x90] sm:$0xff]
  %v41 = vld [vmem:[%s1 + $0x98] sm:$0xff]
  %v42 = vld [vmem:[%s1 + $0xa0] sm:$0xff]
  %v43 = vld [vmem:[%s1 + $0xa8] sm:$0xff]
  %v44 = vld [vmem:[%s1 + $0xb0] sm:$0xff]
  %v45 = vld [vmem:[%s1 + $0xb8] sm:$0xff]
  %v46 = vld [vmem:[%s1 + $0xc0] sm:$0xff]
  %v47 = vld [vmem:[%s1 + $0xc8] sm:$0xff]
  %v48 = vld [vmem:[%s1 + $0xd0] sm:$0xff]
  %v49 = vld [vmem:[%s1 + $0xd8] sm:$0xff]
  %v50 = vld [vmem:[%s1 + $0xe0] sm:$0xff]
  %v51 = vld [vmem:[%s1 + $0xe8] sm:$0xff]
  %v52 = vld [vmem:[%s1 + $0xf0] sm:$0xff]
  %v53 = vld [vmem:[%s1 + $0xf8] sm:$0xff]
  %v54 = vld [vmem:[%s2] sm:$0x3]
  %v56 = vlaneseq
  %v57 = vshrl.u32 %v56, 7
  %v58 = vsub.s32 0, %v57
  %v59 = vrot.slane %v54, %v58
  %v60 = vlaneseq
  %v61 = vshrl.u32 %v60, 7
  %v62 = vsub.s32 1, %v61
  %v63 = vrot.slane %v54, %v62
  %66 = vmatprep.subr.mxu0 %v53
  %67 = vmatpush1.msra.mxu0 %v52
  %68 = vmatprep.subr.mxu0 %v51
  %69 = vmatpush1.msra.mxu0 %v50
  %70 = vmatprep.subr.mxu0 %v49
  %71 = vmatpush1.msra.mxu0 %v48
  %72 = vmatprep.subr.mxu0 %v47
  %73 = vmatpush1.msra.mxu0 %v46
  %74 = vmatprep.subr.mxu0 %v45
  %75 = vmatpush1.msra.mxu0 %v44
  %76 = vmatprep.subr.mxu0 %v43
  %77 = vmatpush1.msra.mxu0 %v42
  %78 = vmatprep.subr.mxu0 %v41
  %79 = vmatpush1.msra.mxu0 %v40
  %80 = vmatprep.subr.mxu0 %v39
  %81 = vmatpush1.msra.mxu0 %v38
  %82 = vmatprep.subr.mxu0 %v37
  %83 = vmatpush1.msra.mxu0 %v36
  %84 = vmatprep.subr.mxu0 %v35
  %85 = vmatpush1.msra.mxu0 %v34
  %86 = vmatprep.subr.mxu0 %v33
  %87 = vmatpush1.msra.mxu0 %v32
  %88 = vmatprep.subr.mxu0 %v31
  %89 = vmatpush1.msra.mxu0 %v30
  %90 = vmatprep.subr.mxu0 %v29
  %91 = vmatpush1.msra.mxu0 %v28
  %92 = vmatprep.subr.mxu0 %v27
  %93 = vmatpush1.msra.mxu0 %v26
  %94 = vmatprep.subr.mxu0 %v25
  %95 = vmatpush1.msra.mxu0 %v24
  %96 = vmatprep.subr.mxu0 %v23
  %97 = vmatpush1.msra.mxu0 %v22
  %98 = vmatprep.subr.mxu0 0.0
  %99 = vmatpush2.msra.mxu0 0.0
  %100 = vmatprep.subr.mxu0 0.0
  %101 = vmatpush2.msra.mxu0 0.0
  %102 = vmatprep.subr.mxu0 0.0
  %103 = vmatpush2.msra.mxu0 0.0
  %104 = vmatprep.subr.mxu0 0.0
  %105 = vmatpush2.msra.mxu0 0.0
  %106 = vmatprep.subr.mxu0 0.0
  %107 = vmatpush2.msra.mxu0 0.0
  %108 = vmatprep.subr.mxu0 0.0
  %109 = vmatpush2.msra.mxu0 0.0
  %110 = vmatprep.subr.mxu0 0.0
  %111 = vmatpush2.msra.mxu0 0.0
  %112 = vmatprep.subr.mxu0 0.0
  %113 = vmatpush2.msra.mxu0 0.0
  %114 = vmatprep.subr.mxu0 0.0
  %115 = vmatpush2.msra.mxu0 0.0
  %116 = vmatprep.subr.mxu0 0.0
  %117 = vmatpush2.msra.mxu0 0.0
  %118 = vmatprep.subr.mxu0 0.0
  %119 = vmatpush2.msra.mxu0 0.0
  %120 = vmatprep.subr.mxu0 0.0
  %121 = vmatpush2.msra.mxu0 0.0
  %122 = vmatprep.subr.mxu0 0.0
  %123 = vmatpush2.msra.mxu0 0.0
  %124 = vmatprep.subr.mxu0 0.0
  %125 = vmatpush2.msra.mxu0 0.0
  %126 = vmatprep.subr.mxu0 0.0
  %127 = vmatpush2.msra.mxu0 0.0
  %128 = vmatprep.subr.mxu0 0.0
  %129 = vmatpush2.msra.mxu0 0.0
  %130 = vmatprep.mubr.f32.mxu0 0.0
  %131 = vmatmul.mubr.f32.gmra.mxu0 %v21
  %v132 = vpop.f32.mrf.mxu0
  %v133 = vadd.f32 %v59, %v132
  %v134 = vpop.f32.mrf.mxu0
  %v135 = vadd.f32 %v63, %v134
  %136 = vdwg.mxu0
  %v137 = vmax.f32 %v133, 0.0
  %v138 = vmax.f32 %v135, 0.0
  %v139 = vld [vmem:[%s3] sm:$0xff]
  %v140 = vld [vmem:[%s3 + $0x8] sm:$0xff]
  %v141 = vld [vmem:[%s3 + $0x10] sm:$0xff]
  %v142 = vld [vmem:[%s3 + $0x18] sm:$0xff]
  %v143 = vld [vmem:[%s3 + $0x20] sm:$0xff]
  %v144 = vld [vmem:[%s3 + $0x28] sm:$0xff]
  %v145 = vld [vmem:[%s3 + $0x30] sm:$0xff]
  %v146 = vld [vmem:[%s3 + $0x38] sm:$0xff]
  %v147 = vld [vmem:[%s3 + $0x40] sm:$0xff]
  %v148 = vld [vmem:[%s3 + $0x48] sm:$0xff]
  %v149 = vld [vmem:[%s3 + $0x50] sm:$0xff]
  %v150 = vld [vmem:[%s3 + $0x58] sm:$0xff]
  %v151 = vld [vmem:[%s3 + $0x60] sm:$0xff]
  %v152 = vld [vmem:[%s3 + $0x68] sm:$0xff]
  %v153 = vld [vmem:[%s3 + $0x70] sm:$0xff]
  %v154 = vld [vmem:[%s3 + $0x78] sm:$0xff]
  %v155 = vld [vmem:[%s3 + $0x80] sm:$0xff]
  %v156 = vld [vmem:[%s3 + $0x88] sm:$0xff]
  %v157 = vld [vmem:[%s3 + $0x90] sm:$0xff]
  %v158 = vld [vmem:[%s3 + $0x98] sm:$0xff]
  %v159 = vld [vmem:[%s3 + $0xa0] sm:$0xff]
  %v160 = vld [vmem:[%s3 + $0xa8] sm:$0xff]
  %v161 = vld [vmem:[%s3 + $0xb0] sm:$0xff]
  %v162 = vld [vmem:[%s3 + $0xb8] sm:$0xff]
  %v163 = vld [vmem:[%s3 + $0xc0] sm:$0xff]
  %v164 = vld [vmem:[%s3 + $0xc8] sm:$0xff]
  %v165 = vld [vmem:[%s3 + $0xd0] sm:$0xff]
  %v166 = vld [vmem:[%s3 + $0xd8] sm:$0xff]
  %v167 = vld [vmem:[%s3 + $0xe0] sm:$0xff]
  %v168 = vld [vmem:[%s3 + $0xe8] sm:$0xff]
  %v169 = vld [vmem:[%s3 + $0xf0] sm:$0xff]
  %v170 = vld [vmem:[%s3 + $0xf8] sm:$0xff]
  %s171 = sld [smem:[#allocation2]]
  %v172 = vstv %s171
  %173 = vmatprep.subr.mxu0 0.0
  %174 = vmatpush1.msra.mxu0 %v154
  %175 = vmatprep.subr.mxu0 0.0
  %176 = vmatpush1.msra.mxu0 %v153
  %177 = vmatprep.subr.mxu0 0.0
  %178 = vmatpush1.msra.mxu0 %v152
  %179 = vmatprep.subr.mxu0 0.0
  %180 = vmatpush1.msra.mxu0 %v151
  %181 = vmatprep.subr.mxu0 0.0
  %182 = vmatpush1.msra.mxu0 %v150
  %183 = vmatprep.subr.mxu0 0.0
  %184 = vmatpush1.msra.mxu0 %v149
  %185 = vmatprep.subr.mxu0 0.0
  %186 = vmatpush1.msra.mxu0 %v148
  %187 = vmatprep.subr.mxu0 0.0
  %188 = vmatpush1.msra.mxu0 %v147
  %189 = vmatprep.subr.mxu0 0.0
  %190 = vmatpush1.msra.mxu0 %v146
  %191 = vmatprep.subr.mxu0 0.0
  %192 = vmatpush1.msra.mxu0 %v145
  %193 = vmatprep.subr.mxu0 0.0
  %194 = vmatpush1.msra.mxu0 %v144
  %195 = vmatprep.subr.mxu0 0.0
  %196 = vmatpush1.msra.mxu0 %v143
  %197 = vmatprep.subr.mxu0 0.0
  %198 = vmatpush1.msra.mxu0 %v142
  %199 = vmatprep.subr.mxu0 0.0
  %200 = vmatpush1.msra.mxu0 %v141
  %201 = vmatprep.subr.mxu0 0.0
  %202 = vmatpush1.msra.mxu0 %v140
  %203 = vmatprep.subr.mxu0 0.0
  %204 = vmatpush1.msra.mxu0 %v139
  %205 = vmatprep.subr.mxu0 0.0
  %206 = vmatpush2.msra.mxu0 %v170
  %207 = vmatprep.subr.mxu0 0.0
  %208 = vmatpush2.msra.mxu0 %v169
  %209 = vmatprep.subr.mxu0 0.0
  %210 = vmatpush2.msra.mxu0 %v168
  %211 = vmatprep.subr.mxu0 0.0
  %212 = vmatpush2.msra.mxu0 %v167
  %213 = vmatprep.subr.mxu0 0.0
  %214 = vmatpush2.msra.mxu0 %v166
  %215 = vmatprep.subr.mxu0 0.0
  %216 = vmatpush2.msra.mxu0 %v165
  %217 = vmatprep.subr.mxu0 0.0
  %218 = vmatpush2.msra.mxu0 %v164
  %219 = vmatprep.subr.mxu0 0.0
  %220 = vmatpush2.msra.mxu0 %v163
  %221 = vmatprep.subr.mxu0 0.0
  %222 = vmatpush2.msra.mxu0 %v162
  %223 = vmatprep.subr.mxu0 0.0
  %224 = vmatpush2.msra.mxu0 %v161
  %225 = vmatprep.subr.mxu0 0.0
  %226 = vmatpush2.msra.mxu0 %v160
  %227 = vmatprep.subr.mxu0 0.0
  %228 = vmatpush2.msra.mxu0 %v159
  %229 = vmatprep.subr.mxu0 0.0
  %230 = vmatpush2.msra.mxu0 %v158
  %231 = vmatprep.subr.mxu0 0.0
  %232 = vmatpush2.msra.mxu0 %v157
  %233 = vmatprep.subr.mxu0 0.0
  %234 = vmatpush2.msra.mxu0 %v156
  %235 = vmatprep.subr.mxu0 0.0
  %236 = vmatpush2.msra.mxu0 %v155
  %237 = vmatprep.mubr.f32.mxu0 %v138
  %238 = vmatmul.mubr.f32.gmra.mxu0 %v137
  %v239 = vpop.f32.mrf.mxu0
  %v240 = vadd.f32 %v172, %v239
  %v241 = vpop.f32.mrf.mxu0
  %242 = vdwg.mxu0
  %vm243 = vcmask 64512
  %244 = vst.msk [vmem:[%s5] sm:$0xff] %vm243, %v240
  // Predicated region
  $region22: #{state_value_forward.1} parent=0 // pred_check
    _
  $region23: #{state_value_forward.1} parent=0 // pred_check_branch
    %246 = sbr.rel (0) target = $region25
  $region24: #{state_value_forward.1} parent=0 // pred_region
    _
  $region25: #{state_value_forward.1} parent=0 // pred_fallthru
    _
  // Predicated region
  $region26: #{state_value_forward.1} parent=0 // pred_check
    _
  $region27: #{state_value_forward.1} parent=0 // pred_check_branch
    %248 = sbr.rel (0) target = $region29
  $region28: #{state_value_forward.1} parent=0 // pred_region
    _
  $region29: #{state_value_forward.1} parent=0 // pred_fallthru
    _

</llo_original>
